<compile_context>
chip_gen: v7x
topology: tpu7x:2x2x1
jax: 0.10.0
libtpu: 0.0.40
codegen_flags: <defaults>
</compile_context>

<pallas_src>
import functools

import jax
import jax.numpy as jnp
from jax.experimental import pallas as pl
from jax.experimental.pallas import tpu as pltpu


def _mixer_ts_kernel(sig_ref, mix_ref, out_ref):
    # sig_ref, mix_ref: (C, tile_be, tile_s)   out_ref: (tile_be, tile_s)
    # Channel-unrolled accumulate keeps the live f32 intermediate to a single
    # (tile_be, tile_s) slab instead of a (C, tile_be, tile_s) product.
    acc = sig_ref[0].astype(jnp.float32) * mix_ref[0].astype(jnp.float32)
    for c in range(1, sig_ref.shape[0]):
        acc = acc + sig_ref[c].astype(jnp.float32) * mix_ref[c].astype(jnp.float32)
    out_ref[...] = acc.astype(out_ref.dtype)


def _mixer_global_kernel(sig_ref, mix_ref, out_ref):
    # sig_ref: (C, tile_be, tile_s)   mix_ref: (tile_be, C)   out_ref: (tile_be, tile_s)
    m = mix_ref[...].astype(jnp.float32)              # tiny, resident coefficients
    acc = sig_ref[0].astype(jnp.float32) * m[:, 0:1]  # (tile_be, 1) lane-broadcast
    for c in range(1, sig_ref.shape[0]):
        acc = acc + sig_ref[c].astype(jnp.float32) * m[:, c:c + 1]
    out_ref[...] = acc.astype(out_ref.dtype)


def _pick_tile(total, align, max_tile):
    """Largest block size <= max_tile that is a multiple of `align` and evenly
    divides `total`; falls back to the full dimension (always legal)."""
    if total <= max_tile:
        return total
    t = (max_tile // align) * align
    while t >= align:
        if total % t == 0:
            return t
        t -= align
    return total


@functools.partial(jax.jit, static_argnames=("max_tile_be", "max_tile_s"))
def mixer(signals, mix, *, max_tile_be=64, max_tile_s=2048):
    """signals: list of (B, E, S) arrays; mix: (B, E, S, C) or (B, E, 1, C)."""
    n_channels = len(signals)
    B, E, S = signals[0].shape
    for s in signals:
        assert s.shape == (B, E, S)
    BE = B * E

    is_time_series = mix.shape == (B, E, S, n_channels)
    is_global = mix.shape == (B, E, 1, n_channels)
    assert is_time_series or is_global

    out_dtype = jnp.result_type(*(s.dtype for s in signals), mix.dtype)

    # (C, BE, S): pure concat + free reshape (no transpose of the signals).
    sig = jnp.stack(signals, axis=0).reshape(n_channels, BE, S)

    # ---- tile selection -------------------------------------------------
    tile_be = _pick_tile(BE, 8, max_tile_be)
    # Keep each (C, tile_be, tile_s) input block around <= 2 MiB so the
    # double-buffered working set fits comfortably inside v7x's 64 MiB VMEM.
    itemsize = jnp.dtype(sig.dtype).itemsize
    budget = 2 * 1024 * 1024
    ts_cap = max(128, (budget // max(1, n_channels * tile_be * itemsize)) // 128 * 128)
    tile_s = _pick_tile(S, 128, min(max_tile_s, ts_cap))

    grid = (BE // tile_be, S // tile_s)

    sig_spec = pl.BlockSpec((n_channels, tile_be, tile_s), lambda i, j: (0, i, j))
    out_spec = pl.BlockSpec((tile_be, tile_s), lambda i, j: (i, j))

    if is_time_series:
        # One XLA pass moves C from the minor to the major dim so the kernel
        # sees the same dense (C, BE, S) layout as the signals.
        mix_arr = jnp.moveaxis(mix, -1, 0).reshape(n_channels, BE, S)
        mix_spec = pl.BlockSpec((n_channels, tile_be, tile_s), lambda i, j: (0, i, j))
        kernel = _mixer_ts_kernel
        mix_block_bytes = n_channels * tile_be * tile_s * jnp.dtype(mix.dtype).itemsize
    else:
        # Per-row coefficients; block index is constant along the sample grid
        # axis (j), so Pallas only DMAs it when the BE block changes.
        mix_arr = mix.reshape(BE, n_channels)
        mix_spec = pl.BlockSpec((tile_be, n_channels), lambda i, j: (i, 0))
        kernel = _mixer_global_kernel
        mix_block_bytes = tile_be * n_channels * jnp.dtype(mix.dtype).itemsize

    sig_block_bytes = n_channels * tile_be * tile_s * itemsize
    out_block_bytes = tile_be * tile_s * jnp.dtype(out_dtype).itemsize
    pipeline_bytes = 2 * (sig_block_bytes + mix_block_bytes + out_block_bytes)
    vmem_limit = max(16 << 20, min(64 << 20, 2 * pipeline_bytes + (8 << 20)))

    out = pl.pallas_call(
        kernel,
        out_shape=jax.ShapeDtypeStruct((BE, S), out_dtype),
        grid_spec=pltpu.PrefetchScalarGridSpec(
            num_scalar_prefetch=0,
            grid=grid,
            in_specs=[sig_spec, mix_spec],
            out_specs=out_spec,
        ),
        compiler_params=pltpu.CompilerParams(
            # Both axes independent; on v7x this also shards the grid across
            # the two TensorCores when there are >= 2 blocks on an axis.
            dimension_semantics=("parallel", "parallel"),
            vmem_limit_bytes=int(vmem_limit),
        ),
    )(sig, mix_arr)

    return out.reshape(B, E, S)


def _reference(signals, mix):
    stacked = jnp.stack(signals, axis=-1)
    return jnp.sum(stacked * mix, axis=-1)


if __name__ == "__main__":
    key = jax.random.PRNGKey(0)

    # Small config, both mix modes.
    B, E, S, C = 2, 4, 512, 3
    keys = jax.random.split(key, C + 2)
    signals = [jax.random.normal(keys[i], (B, E, S), dtype=jnp.float32)
               for i in range(C)]
    mix_ts = jax.random.normal(keys[C], (B, E, S, C), dtype=jnp.float32)
    mix_gl = jax.random.normal(keys[C + 1], (B, E, 1, C), dtype=jnp.float32)

    out_ts = jax.block_until_ready(mixer(signals, mix_ts))
    out_gl = jax.block_until_ready(mixer(signals, mix_gl))

    assert out_ts.shape == (B, E, S)
    assert out_gl.shape == (B, E, S)
    assert jnp.allclose(out_ts, _reference(signals, mix_ts), atol=1e-5, rtol=1e-5)
    assert jnp.allclose(out_gl, _reference(signals, mix_gl), atol=1e-5, rtol=1e-5)

    # Slightly larger config to exercise a multi-block grid along the sample axis.
    B2, E2, S2, C2 = 2, 16, 4096, 3
    k2 = jax.random.split(keys[-1], C2 + 2)
    signals2 = [jax.random.normal(k2[i], (B2, E2, S2), dtype=jnp.float32)
                for i in range(C2)]
    mix2_ts = jax.random.normal(k2[C2], (B2, E2, S2, C2), dtype=jnp.float32)
    mix2_gl = jax.random.normal(k2[C2 + 1], (B2, E2, 1, C2), dtype=jnp.float32)

    out2_ts = jax.block_until_ready(mixer(signals2, mix2_ts))
    out2_gl = jax.block_until_ready(mixer(signals2, mix2_gl))
    assert jnp.allclose(out2_ts, _reference(signals2, mix2_ts), atol=1e-5, rtol=1e-5)
    assert jnp.allclose(out2_gl, _reference(signals2, mix2_gl), atol=1e-5, rtol=1e-5)

    print("KERNEL_OK")
</pallas_src>

<mosaic_0001>
module attributes {stable_mosaic.version = 11 : i64} {
  func.func @_mixer_ts_kernel(%arg0: i32, %arg1: i32, %arg2: memref<3x8x512xf32, #tpu.memory_space<vmem>>, %arg3: memref<3x8x512xf32, #tpu.memory_space<vmem>>, %arg4: memref<8x512xf32, #tpu.memory_space<vmem>>) attributes {dimension_semantics = [#tpu.dimension_semantics<parallel>, #tpu.dimension_semantics<parallel>], iteration_bounds = array<i64: 1, 1>, scalar_prefetch = 0 : i64, scratch_operands = 0 : i64, tpu.core_type = #tpu.core_type<tc>, window_params = [{transform_indices = @transform_0, window_bounds = array<i64: 3, 8, 512>}, {transform_indices = @transform_1, window_bounds = array<i64: 3, 8, 512>}, {transform_indices = @transform_2, window_bounds = array<i64: 8, 512>}]} {
    %c0 = arith.constant 0 : index
    %c0_0 = arith.constant 0 : index
    %c0_1 = arith.constant 0 : index
    %0 = vector.load %arg2[%c0, %c0_0, %c0_1] : memref<3x8x512xf32, #tpu.memory_space<vmem>>, vector<1x8x512xf32>
    %1 = vector.shape_cast %0 : vector<1x8x512xf32> to vector<8x512xf32>
    %c0_2 = arith.constant 0 : index
    %c0_3 = arith.constant 0 : index
    %c0_4 = arith.constant 0 : index
    %2 = vector.load %arg3[%c0_2, %c0_3, %c0_4] : memref<3x8x512xf32, #tpu.memory_space<vmem>>, vector<1x8x512xf32>
    %3 = vector.shape_cast %2 : vector<1x8x512xf32> to vector<8x512xf32>
    %4 = arith.mulf %1, %3 : vector<8x512xf32>
    %c1 = arith.constant 1 : index
    %c0_5 = arith.constant 0 : index
    %c0_6 = arith.constant 0 : index
    %5 = vector.load %arg2[%c1, %c0_5, %c0_6] : memref<3x8x512xf32, #tpu.memory_space<vmem>>, vector<1x8x512xf32>
    %6 = vector.shape_cast %5 : vector<1x8x512xf32> to vector<8x512xf32>
    %c1_7 = arith.constant 1 : index
    %c0_8 = arith.constant 0 : index
    %c0_9 = arith.constant 0 : index
    %7 = vector.load %arg3[%c1_7, %c0_8, %c0_9] : memref<3x8x512xf32, #tpu.memory_space<vmem>>, vector<1x8x512xf32>
    %8 = vector.shape_cast %7 : vector<1x8x512xf32> to vector<8x512xf32>
    %9 = arith.mulf %6, %8 : vector<8x512xf32>
    %10 = arith.addf %4, %9 : vector<8x512xf32>
    %c2 = arith.constant 2 : index
    %c0_10 = arith.constant 0 : index
    %c0_11 = arith.constant 0 : index
    %11 = vector.load %arg2[%c2, %c0_10, %c0_11] : memref<3x8x512xf32, #tpu.memory_space<vmem>>, vector<1x8x512xf32>
    %12 = vector.shape_cast %11 : vector<1x8x512xf32> to vector<8x512xf32>
    %c2_12 = arith.constant 2 : index
    %c0_13 = arith.constant 0 : index
    %c0_14 = arith.constant 0 : index
    %13 = vector.load %arg3[%c2_12, %c0_13, %c0_14] : memref<3x8x512xf32, #tpu.memory_space<vmem>>, vector<1x8x512xf32>
    %14 = vector.shape_cast %13 : vector<1x8x512xf32> to vector<8x512xf32>
    %15 = arith.mulf %12, %14 : vector<8x512xf32>
    %16 = arith.addf %10, %15 : vector<8x512xf32>
    %c0_15 = arith.constant 0 : index
    %c0_16 = arith.constant 0 : index
    %17 = vector.load %arg4[%c0_15, %c0_16] : memref<8x512xf32, #tpu.memory_space<vmem>>, vector<8x512xf32>
    tpu.vector_store %arg4[%c0_15, %c0_16], %16 {strides = array<i32>} : memref<8x512xf32, #tpu.memory_space<vmem>>, vector<8x512xf32>,
    return
  }
  func.func @transform_0(%arg0: i32, %arg1: i32) -> (i32, i32, i32) {
    %c0_i32 = arith.constant 0 : i32
    %c0_i32_0 = arith.constant 0 : i32
    return %c0_i32, %arg0, %arg1 : i32, i32, i32
  }
  func.func @transform_1(%arg0: i32, %arg1: i32) -> (i32, i32, i32) {
    %c0_i32 = arith.constant 0 : i32
    %c0_i32_0 = arith.constant 0 : i32
    return %c0_i32, %arg0, %arg1 : i32, i32, i32
  }
  func.func @transform_2(%arg0: i32, %arg1: i32) -> (i32, i32) {
    %c0_i32 = arith.constant 0 : i32
    return %arg0, %arg1 : i32, i32
  }
}

</mosaic_0001>

<llo_original>
// kernel: mixer.1
$region0: #{mixer.1}
  #allocation0 [shape = 'u32[]', space=smem, size = 0x4, offset = 0x4, fixed_abs, tag = 'smem constant byte address 0x4 - core index']
  #allocation1 [shape = 'u32[144,128]{1,0:T(1,128)}', space=vmem, size = 0x12000, scoped, tag = 'internal scratch']
  %s0 = inlined_call_operand.vmem [shape: f32[3,8,512], index: 0, kind: input, shape index: {}]
  %s1 = inlined_call_operand.vmem [shape: f32[3,8,512], index: 1, kind: input, shape index: {}]
  %s2 = inlined_call_operand.vmem [shape: f32[8,512], index: 2, kind: output, shape index: {}]
  %s3 = sld [smem:[#allocation0]]
  $region18: #{mixer.1} parent=0
    _
  %s5 = ssub.s32 1, %s3
  %s6 = scalar_select 0, %s5, %s3
  // Predicated region
  $region2: #{mixer.1} parent=0 // pred_check
    _
  $region3: #{mixer.1} parent=0 // pred_check_branch
    %8 = sbr.rel (0) target = $region5
  $region4: #{mixer.1} parent=0 // pred_region
    _
  $region5: #{mixer.1} parent=0 // pred_fallthru
    _
  // Predicated region
  $region6: #{mixer.1} parent=0 // pred_check
    _
  $region7: #{mixer.1} parent=0 // pred_check_branch
    %10 = sbr.rel (0) target = $region9
  $region8: #{mixer.1} parent=0 // pred_region
    _
  $region9: #{mixer.1} parent=0 // pred_fallthru
    _
  %v11 = vld [vmem:[%s0] sm:$0xff]
  %v12 = vld [vmem:[%s0 + $0x8] sm:$0xff]
  %v13 = vld [vmem:[%s0 + $0x10] sm:$0xff]
  %v14 = vld [vmem:[%s0 + $0x18] sm:$0xff]
  %v15 = vld [vmem:[%s1] sm:$0xff]
  %v16 = vld [vmem:[%s1 + $0x8] sm:$0xff]
  %v17 = vld [vmem:[%s1 + $0x10] sm:$0xff]
  %v18 = vld [vmem:[%s1 + $0x18] sm:$0xff]
  %v19 = vmul.f32 %v11, %v15
  %v20 = vmul.f32 %v12, %v16
  %v21 = vmul.f32 %v13, %v17
  %v22 = vmul.f32 %v14, %v18
  %s23 = scalar_lea.vmem %s0, 32
  %v24 = vld [vmem:[%s23] sm:$0xff]
  %v25 = vld [vmem:[%s23 + $0x8] sm:$0xff]
  %v26 = vld [vmem:[%s23 + $0x10] sm:$0xff]
  %v27 = vld [vmem:[%s23 + $0x18] sm:$0xff]
  %s28 = scalar_lea.vmem %s1, 32
  %v29 = vld [vmem:[%s28] sm:$0xff]
  %v30 = vld [vmem:[%s28 + $0x8] sm:$0xff]
  %v31 = vld [vmem:[%s28 + $0x10] sm:$0xff]
  %v32 = vld [vmem:[%s28 + $0x18] sm:$0xff]
  %v33 = vmul.f32 %v24, %v29
  %v34 = vmul.f32 %v25, %v30
  %v35 = vmul.f32 %v26, %v31
  %v36 = vmul.f32 %v27, %v32
  %v37 = vadd.f32 %v19, %v33
  %v38 = vadd.f32 %v20, %v34
  %v39 = vadd.f32 %v21, %v35
  %v40 = vadd.f32 %v22, %v36
  %s41 = scalar_lea.vmem %s0, 64
  %v42 = vld [vmem:[%s41] sm:$0xff]
  %v43 = vld [vmem:[%s41 + $0x8] sm:$0xff]
  %v44 = vld [vmem:[%s41 + $0x10] sm:$0xff]
  %v45 = vld [vmem:[%s41 + $0x18] sm:$0xff]
  %s46 = scalar_lea.vmem %s1, 64
  %v47 = vld [vmem:[%s46] sm:$0xff]
  %v48 = vld [vmem:[%s46 + $0x8] sm:$0xff]
  %v49 = vld [vmem:[%s46 + $0x10] sm:$0xff]
  %v50 = vld [vmem:[%s46 + $0x18] sm:$0xff]
  %v51 = vmul.f32 %v42, %v47
  %v52 = vmul.f32 %v43, %v48
  %v53 = vmul.f32 %v44, %v49
  %v54 = vmul.f32 %v45, %v50
  %v55 = vadd.f32 %v37, %v51
  %v56 = vadd.f32 %v38, %v52
  %v57 = vadd.f32 %v39, %v53
  %v58 = vadd.f32 %v40, %v54
  %59 = vst [vmem:[%s2] sm:$0xff] %v55
  %60 = vst [vmem:[%s2 + $0x8] sm:$0xff] %v56
  %61 = vst [vmem:[%s2 + $0x10] sm:$0xff] %v57
  %62 = vst [vmem:[%s2 + $0x18] sm:$0xff] %v58
  // Predicated region
  $region10: #{mixer.1} parent=0 // pred_check
    _
  $region11: #{mixer.1} parent=0 // pred_check_branch
    %64 = sbr.rel (0) target = $region13
  $region12: #{mixer.1} parent=0 // pred_region
    _
  $region13: #{mixer.1} parent=0 // pred_fallthru
    _
  // Predicated region
  $region14: #{mixer.1} parent=0 // pred_check
    _
  $region15: #{mixer.1} parent=0 // pred_check_branch
    %66 = sbr.rel (0) target = $region17
  $region16: #{mixer.1} parent=0 // pred_region
    _
  $region17: #{mixer.1} parent=0 // pred_fallthru
    _

</llo_original>
